<compile_context>
chip_gen: v5e
topology: v5e:2x2
jax: 0.10.0
libtpu: 0.0.40
codegen_flags: <defaults>
</compile_context>

<pallas_src>
import functools

import jax
import jax.numpy as jnp
from jax import lax
from jax.experimental import pallas as pl
from jax.experimental.pallas import tpu as pltpu


def _fusion_kernel(x_ref, y_ref, wqk_ref, bqk_ref, wv_ref, bv_ref, gamma_ref,
                   o_ref, *, batch_block, compute_dtype):
    # x_ref          : (bb, N, C) float32 (kept f32 for the exact residual)
    # y_ref          : (bb, N, C) compute_dtype
    # wqk_ref        : (C, C)  = Wq^T @ Wk            (compute_dtype)
    # bqk_ref        : (1, C)  = bq @ Wk              (float32)
    # wv_ref         : (C, C)  = Wv^T                 (compute_dtype)
    # bv_ref         : (1, C)                          (float32)
    # gamma_ref      : (1, 1) scalar in SMEM
    gamma = gamma_ref[0, 0]
    approx = compute_dtype == jnp.bfloat16

    for b in range(batch_block):            # static unroll, batch_block is tiny
        x = x_ref[b]                         # (N, C) f32
        xc = x.astype(compute_dtype)
        yc = y_ref[b].astype(compute_dtype)  # (N, C)

        # energy = (x Wq^T + bq)(y Wk^T + bk)^T with row-constant terms dropped
        #        = (x (Wq^T Wk) + bq Wk) @ y^T
        xw = jnp.dot(xc, wqk_ref[...], preferred_element_type=jnp.float32)
        xw = xw + bqk_ref[...]                                        # (N, C)
        energy = lax.dot_general(                                     # NT form
            xw.astype(compute_dtype), yc,
            dimension_numbers=(((1,), (1,)), ((), ())),
            preferred_element_type=jnp.float32)                       # (N, N)

        # softmax over last axis; normalization deferred past the p @ v matmul
        m = jnp.max(energy, axis=-1, keepdims=True)
        p = jnp.exp(energy - m)                                       # (N, N)
        denom = jnp.sum(p, axis=-1, keepdims=True)                    # (N, 1)

        v = jnp.dot(yc, wv_ref[...], preferred_element_type=jnp.float32)
        v = v + bv_ref[...]                                           # (N, C)

        out = jnp.dot(p.astype(compute_dtype), v.astype(compute_dtype),
                      preferred_element_type=jnp.float32)             # (N, C)
        out = out * pl.reciprocal(denom, approx=approx)

        o_ref[b] = gamma * out + x


def fusion_pallas(x_nchw, y_nchw, wq, bq, wk, bk, wv, bv, gamma, *,
                  use_bf16=True, batch_block=1):
    """x_nchw, y_nchw: (B, C, H, W) float32.
    wq/wk: (C//8, C), wv: (C, C) (PyTorch 1x1-conv weights squeezed),
    biases: (C//8,)/(C,). gamma: scalar.
    batch_block: batches processed per grid step (set to B to collapse the grid
    on single-TensorCore chips such as v5e/v6e)."""
    B, C, H, W = x_nchw.shape
    N = H * W
    assert B % batch_block == 0
    compute_dtype = jnp.bfloat16 if use_bf16 else jnp.float32

    # NCHW -> (B, N, C); XLA fuses transpose+reshape into one copy per tensor.
    x = jnp.transpose(x_nchw, (0, 2, 3, 1)).reshape(B, N, C).astype(jnp.float32)
    y = jnp.transpose(y_nchw, (0, 2, 3, 1)).reshape(B, N, C).astype(compute_dtype)

    # Fold Wq / Wk / bq into one (C, C) weight and a per-column bias.
    wqk = (wq.T @ wk).astype(compute_dtype)               # (C, C)
    bqk = (bq @ wk).reshape(1, C).astype(jnp.float32)     # (1, C)
    wv_t = wv.T.astype(compute_dtype)                     # (C, C)
    bv2 = bv.reshape(1, C).astype(jnp.float32)            # (1, C)
    gamma2 = jnp.asarray(gamma, jnp.float32).reshape(1, 1)

    kernel = functools.partial(_fusion_kernel, batch_block=batch_block,
                               compute_dtype=compute_dtype)

    out = pl.pallas_call(
        kernel,
        out_shape=jax.ShapeDtypeStruct((B, N, C), jnp.float32),
        grid_spec=pltpu.PrefetchScalarGridSpec(
            num_scalar_prefetch=0,
            grid=(B // batch_block,),
            in_specs=[
                pl.BlockSpec((batch_block, N, C), lambda i: (i, 0, 0)),  # x
                pl.BlockSpec((batch_block, N, C), lambda i: (i, 0, 0)),  # y
                # Constant index maps -> these stay VMEM-resident across steps.
                pl.BlockSpec((C, C), lambda i: (0, 0)),                  # Wq^T Wk
                pl.BlockSpec((1, C), lambda i: (0, 0)),                  # bq Wk
                pl.BlockSpec((C, C), lambda i: (0, 0)),                  # Wv^T
                pl.BlockSpec((1, C), lambda i: (0, 0)),                  # bv
                pl.BlockSpec(memory_space=pltpu.MemorySpace.SMEM),       # gamma
            ],
            out_specs=pl.BlockSpec((batch_block, N, C), lambda i: (i, 0, 0)),
        ),
        compiler_params=pltpu.CompilerParams(
            dimension_semantics=("parallel",)),
    )(x, y, wqk, bqk, wv_t, bv2, gamma2)

    # (B, N, C) -> (B, C, H, W)
    return jnp.transpose(out.reshape(B, H, W, C), (0, 3, 1, 2))


def fusion_reference(x_nchw, y_nchw, wq, bq, wk, bk, wv, bv, gamma):
    """Pure-JAX f32 reference mirroring the PyTorch forward (for verification)."""
    B, C, H, W = x_nchw.shape
    N = H * W
    xf = x_nchw.reshape(B, C, N)
    yf = y_nchw.reshape(B, C, N)
    q = jnp.einsum('oc,bcn->bon', wq, xf) + bq[None, :, None]   # (B, C8, N)
    k = jnp.einsum('oc,bcn->bon', wk, yf) + bk[None, :, None]   # (B, C8, N)
    v = jnp.einsum('oc,bcn->bon', wv, yf) + bv[None, :, None]   # (B, C,  N)
    energy = jnp.einsum('bci,bcj->bij', q, k)                   # (B, N, N)
    attn = jax.nn.softmax(energy, axis=-1)
    out = jnp.einsum('bcj,bij->bci', v, attn).reshape(B, C, H, W)
    return gamma * out + x_nchw


if __name__ == "__main__":
    key = jax.random.PRNGKey(0)
    B, C, H, W = 2, 32, 8, 8          # in_dim = 32  ->  C//8 = 4
    C8 = C // 8

    ks = jax.random.split(key, 8)
    x = jax.random.normal(ks[0], (B, C, H, W), jnp.float32)
    y = jax.random.normal(ks[1], (B, C, H, W), jnp.float32)

    # Conv2d(kernel_size=1) weights, squeezed to (out, in); biases (out,)
    wq = jax.random.normal(ks[2], (C8, C), jnp.float32) * 0.1
    bq = jax.random.normal(ks[3], (C8,), jnp.float32) * 0.1
    wk = jax.random.normal(ks[4], (C8, C), jnp.float32) * 0.1
    bk = jax.random.normal(ks[5], (C8,), jnp.float32) * 0.1
    wv = jax.random.normal(ks[6], (C, C), jnp.float32) * 0.1
    bv = jax.random.normal(ks[7], (C,), jnp.float32) * 0.1

    # 1) module default gamma = 0 (output == x exactly; residual is f32)
    gamma0 = jnp.zeros((), jnp.float32)
    out0 = jax.block_until_ready(
        fusion_pallas(x, y, wq, bq, wk, bk, wv, bv, gamma0))
    ref0 = fusion_reference(x, y, wq, bq, wk, bk, wv, bv, gamma0)
    assert jnp.allclose(out0, ref0, atol=1e-5, rtol=1e-5)

    # 2) nonzero gamma, full-precision path (tight check of the math)
    gamma1 = jnp.asarray(0.5, jnp.float32)
    out_f32 = jax.block_until_ready(
        fusion_pallas(x, y, wq, bq, wk, bk, wv, bv, gamma1, use_bf16=False))
    ref1 = fusion_reference(x, y, wq, bq, wk, bk, wv, bv, gamma1)
    assert jnp.allclose(out_f32, ref1, atol=1e-4, rtol=1e-4)

    # 3) collapsed-grid variant (single kernel step, as recommended for v5e/v6e)
    out_collapsed = jax.block_until_ready(
        fusion_pallas(x, y, wq, bq, wk, bk, wv, bv, gamma1,
                      use_bf16=False, batch_block=B))
    assert jnp.allclose(out_collapsed, ref1, atol=1e-4, rtol=1e-4)

    # 4) default fast path: bf16 MXU operands, f32 accumulation + residual
    out_bf16 = jax.block_until_ready(
        fusion_pallas(x, y, wq, bq, wk, bk, wv, bv, gamma1))
    assert jnp.allclose(out_bf16, ref1, atol=2e-2, rtol=2e-2)

    print("KERNEL_OK")
</pallas_src>

<mosaic_0001>
module attributes {stable_mosaic.version = 11 : i64} {
  func.func @_fusion_kernel(%arg0: i32, %arg1: memref<1x64x32xf32, #tpu.memory_space<vmem>>, %arg2: memref<1x64x32xbf16, #tpu.memory_space<vmem>>, %arg3: memref<32x32xbf16, #tpu.memory_space<vmem>>, %arg4: memref<1x32xf32, #tpu.memory_space<vmem>>, %arg5: memref<32x32xbf16, #tpu.memory_space<vmem>>, %arg6: memref<1x32xf32, #tpu.memory_space<vmem>>, %arg7: memref<1x1xf32, #tpu.memory_space<smem>>, %arg8: memref<1x64x32xf32, #tpu.memory_space<vmem>>) attributes {dimension_semantics = [#tpu.dimension_semantics<parallel>], iteration_bounds = array<i64: 2>, scalar_prefetch = 0 : i64, scratch_operands = 0 : i64, tpu.core_type = #tpu.core_type<tc>, window_params = [{transform_indices = @transform_0, window_bounds = array<i64: 1, 64, 32>}, {transform_indices = @transform_1, window_bounds = array<i64: 1, 64, 32>}, {pipeline_mode = #tpu.pipeline_mode<synchronous>, transform_indices = @transform_2, window_bounds = array<i64: 32, 32>}, {pipeline_mode = #tpu.pipeline_mode<synchronous>, transform_indices = @transform_3, window_bounds = array<i64: 1, 32>}, {pipeline_mode = #tpu.pipeline_mode<synchronous>, transform_indices = @transform_4, window_bounds = array<i64: 32, 32>}, {pipeline_mode = #tpu.pipeline_mode<synchronous>, transform_indices = @transform_5, window_bounds = array<i64: 1, 32>}, {transform_indices = @transform_6, window_bounds = array<i64: 1, 1>}, {transform_indices = @transform_7, window_bounds = array<i64: 1, 64, 32>}]} {
    %c0 = arith.constant 0 : index
    %c0_0 = arith.constant 0 : index
    %0 = memref.load %arg7[%c0, %c0_0] : memref<1x1xf32, #tpu.memory_space<smem>>
    %c0_1 = arith.constant 0 : index
    %c0_2 = arith.constant 0 : index
    %c0_3 = arith.constant 0 : index
    %1 = vector.load %arg1[%c0_1, %c0_2, %c0_3] : memref<1x64x32xf32, #tpu.memory_space<vmem>>, vector<1x64x32xf32>
    %2 = vector.shape_cast %1 : vector<1x64x32xf32> to vector<64x32xf32>
    %3 = arith.truncf %2 : vector<64x32xf32> to vector<64x32xbf16>
    %c0_4 = arith.constant 0 : index
    %c0_5 = arith.constant 0 : index
    %c0_6 = arith.constant 0 : index
    %4 = vector.load %arg2[%c0_4, %c0_5, %c0_6] : memref<1x64x32xbf16, #tpu.memory_space<vmem>>, vector<1x64x32xbf16>
    %5 = vector.shape_cast %4 : vector<1x64x32xbf16> to vector<64x32xbf16>
    %c0_7 = arith.constant 0 : index
    %c0_8 = arith.constant 0 : index
    %6 = vector.load %arg3[%c0_7, %c0_8] : memref<32x32xbf16, #tpu.memory_space<vmem>>, vector<32x32xbf16>
    %cst = arith.constant dense<0.000000e+00> : vector<64x32xf32>
    %7 = tpu.matmul %3, %6, %cst {dimension_numbers = #tpu.dot_dimension_numbers<[1], [0], [0], [1], [0, 0, 1, 1], [], []>} : vector<64x32xbf16>, vector<32x32xbf16>, vector<64x32xf32> -> vector<64x32xf32>
    %c0_9 = arith.constant 0 : index
    %c0_10 = arith.constant 0 : index
    %8 = vector.load %arg4[%c0_9, %c0_10] : memref<1x32xf32, #tpu.memory_space<vmem>>, vector<1x32xf32>
    %9 = vector.broadcast %8 : vector<1x32xf32> to vector<64x32xf32>
    %10 = arith.addf %7, %9 : vector<64x32xf32>
    %11 = arith.truncf %10 : vector<64x32xf32> to vector<64x32xbf16>
    %cst_11 = arith.constant dense<0.000000e+00> : vector<64x64xf32>
    %12 = tpu.matmul %11, %5, %cst_11 {dimension_numbers = #tpu.dot_dimension_numbers<[1], [1], [0], [0], [0, 0, 1, 0], [], []>} : vector<64x32xbf16>, vector<64x32xbf16>, vector<64x64xf32> -> vector<64x64xf32>
    %cst_12 = arith.constant dense<0xFF800000> : vector<64xf32>
    %13 = vector.multi_reduction <maximumf>, %12, %cst_12 [1] : vector<64x64xf32> to vector<64xf32>
    %14 = vector.shape_cast %13 : vector<64xf32> to vector<64x1xf32>
    %15 = vector.broadcast %14 : vector<64x1xf32> to vector<64x64xf32>
    %16 = arith.subf %12, %15 : vector<64x64xf32>
    %17 = math.exp %16 : vector<64x64xf32>
    %cst_13 = arith.constant dense<0.000000e+00> : vector<64xf32>
    %18 = vector.multi_reduction <add>, %17, %cst_13 [1] : vector<64x64xf32> to vector<64xf32>
    %19 = vector.shape_cast %18 : vector<64xf32> to vector<64x1xf32>
    %c0_14 = arith.constant 0 : index
    %c0_15 = arith.constant 0 : index
    %20 = vector.load %arg5[%c0_14, %c0_15] : memref<32x32xbf16, #tpu.memory_space<vmem>>, vector<32x32xbf16>
    %cst_16 = arith.constant dense<0.000000e+00> : vector<64x32xf32>
    %21 = tpu.matmul %5, %20, %cst_16 {dimension_numbers = #tpu.dot_dimension_numbers<[1], [0], [0], [1], [0, 0, 1, 1], [], []>} : vector<64x32xbf16>, vector<32x32xbf16>, vector<64x32xf32> -> vector<64x32xf32>
    %c0_17 = arith.constant 0 : index
    %c0_18 = arith.constant 0 : index
    %22 = vector.load %arg6[%c0_17, %c0_18] : memref<1x32xf32, #tpu.memory_space<vmem>>, vector<1x32xf32>
    %23 = vector.broadcast %22 : vector<1x32xf32> to vector<64x32xf32>
    %24 = arith.addf %21, %23 : vector<64x32xf32>
    %25 = arith.truncf %17 : vector<64x64xf32> to vector<64x64xbf16>
    %26 = arith.truncf %24 : vector<64x32xf32> to vector<64x32xbf16>
    %cst_19 = arith.constant dense<0.000000e+00> : vector<64x32xf32>
    %27 = tpu.matmul %25, %26, %cst_19 {dimension_numbers = #tpu.dot_dimension_numbers<[1], [0], [0], [1], [0, 0, 1, 1], [], []>} : vector<64x64xbf16>, vector<64x32xbf16>, vector<64x32xf32> -> vector<64x32xf32>
    %28 = tpu.reciprocal %19 {approx = true} : vector<64x1xf32> -> vector<64x1xf32>
    %29 = vector.broadcast %28 : vector<64x1xf32> to vector<64x32xf32>
    %30 = arith.mulf %27, %29 : vector<64x32xf32>
    %31 = vector.broadcast %0 : f32 to vector<64x32xf32>
    %32 = arith.mulf %31, %30 : vector<64x32xf32>
    %33 = arith.addf %32, %2 : vector<64x32xf32>
    %c0_20 = arith.constant 0 : index
    %c0_21 = arith.constant 0 : index
    %c0_22 = arith.constant 0 : index
    %34 = vector.load %arg8[%c0_20, %c0_21, %c0_22] : memref<1x64x32xf32, #tpu.memory_space<vmem>>, vector<1x64x32xf32>
    %35 = vector.shape_cast %34 : vector<1x64x32xf32> to vector<64x32xf32>
    %36 = vector.shape_cast %33 : vector<64x32xf32> to vector<1x64x32xf32>
    tpu.vector_store %arg8[%c0_20, %c0_21, %c0_22], %36 {strides = array<i32>} : memref<1x64x32xf32, #tpu.memory_space<vmem>>, vector<1x64x32xf32>,
    return
  }
  func.func @transform_0(%arg0: i32) -> (i32, i32, i32) {
    %c0_i32 = arith.constant 0 : i32
    %c0_i32_0 = arith.constant 0 : i32
    %c0_i32_1 = arith.constant 0 : i32
    return %arg0, %c0_i32, %c0_i32_0 : i32, i32, i32
  }
  func.func @transform_1(%arg0: i32) -> (i32, i32, i32) {
    %c0_i32 = arith.constant 0 : i32
    %c0_i32_0 = arith.constant 0 : i32
    %c0_i32_1 = arith.constant 0 : i32
    return %arg0, %c0_i32, %c0_i32_0 : i32, i32, i32
  }
  func.func @transform_2(%arg0: i32) -> (i32, i32) {
    %c0_i32 = arith.constant 0 : i32
    %c0_i32_0 = arith.constant 0 : i32
    %c0_i32_1 = arith.constant 0 : i32
    return %c0_i32, %c0_i32_0 : i32, i32
  }
  func.func @transform_3(%arg0: i32) -> (i32, i32) {
    %c0_i32 = arith.constant 0 : i32
    %c0_i32_0 = arith.constant 0 : i32
    %c0_i32_1 = arith.constant 0 : i32
    return %c0_i32, %c0_i32_0 : i32, i32
  }
  func.func @transform_4(%arg0: i32) -> (i32, i32) {
    %c0_i32 = arith.constant 0 : i32
    %c0_i32_0 = arith.constant 0 : i32
    %c0_i32_1 = arith.constant 0 : i32
    return %c0_i32, %c0_i32_0 : i32, i32
  }
  func.func @transform_5(%arg0: i32) -> (i32, i32) {
    %c0_i32 = arith.constant 0 : i32
    %c0_i32_0 = arith.constant 0 : i32
    %c0_i32_1 = arith.constant 0 : i32
    return %c0_i32, %c0_i32_0 : i32, i32
  }
  func.func @transform_6(%arg0: i32) -> (i32, i32) {
    %c0_i32 = arith.constant 0 : i32
    %c0_i32_0 = arith.constant 0 : i32
    %c0_i32_1 = arith.constant 0 : i32
    return %c0_i32, %c0_i32_0 : i32, i32
  }
  func.func @transform_7(%arg0: i32) -> (i32, i32, i32) {
    %c0_i32 = arith.constant 0 : i32
    %c0_i32_0 = arith.constant 0 : i32
    %c0_i32_1 = arith.constant 0 : i32
    return %arg0, %c0_i32, %c0_i32_0 : i32, i32, i32
  }
}

</mosaic_0001>

<llo_original>
// kernel: tpu_custom_call.1
$region0: #{tpu_custom_call.1}
  #allocation0 [shape = 'u32[]', space=smem, size = 0x4, offset = 0x4, fixed_abs, tag = 'smem constant byte address 0x4 - core index']
  #allocation1 [shape = 'u32[72,128]{1,0:T(1,128)}', space=vmem, size = 0x9000, scoped, tag = 'internal scratch']
  #allocation2 [shape = 'f32[1,1]{1,0:T(1,128)S(6)}', space=smem, size = 0x200, scoped, tag = 'scoped memory for tpu_custom_call.1']
  %s0 = inlined_call_operand.vmem [shape: f32[2,64,32], index: 0, kind: input, shape index: {}]
  %s1 = inlined_call_operand.vmem [shape: bf16[2,64,32], index: 1, kind: input, shape index: {}]
  %s2 = inlined_call_operand.vmem [shape: bf16[32,32], index: 2, kind: input, shape index: {}]
  %s3 = inlined_call_operand.vmem [shape: f32[1,32], index: 3, kind: input, shape index: {}]
  %s4 = inlined_call_operand.vmem [shape: bf16[32,32], index: 4, kind: input, shape index: {}]
  %s5 = inlined_call_operand.vmem [shape: f32[1,32], index: 5, kind: input, shape index: {}]
  %s6 = inlined_call_operand.<no memory space> [shape: f32[1,1], index: 6, kind: input, shape index: {}]
  %s7 = inlined_call_operand.vmem [shape: f32[2,64,32], index: 7, kind: output, shape index: {}]
  %s8 = sld [smem:[#allocation0]]
  $region61: #{tpu_custom_call.1} parent=0
    _
  %s10 = ssub.s32 1, %s8
  %s11 = scalar_select 0, %s10, %s8
  %12 = sst [smem:[#allocation2]] %s6
  loop: start=0, step=1, limit=4
  $region2: #{tpu_custom_call.1} parent=0 // loop_pre_header
    _
  $region3: #{tpu_custom_call.1} parent=0 // loop_header
    %s14 = sphi 0, %s18
    %p15 = scmp.ge.s32.totalorder %s14, 4
    %s24 = sphi 0, %s26
    %s27 = sphi 0, %s24
    %s28 = sphi 0, %s27
    %s44 = sphi 0, %s28
    %s50 = sphi 0, %s52
    %s53 = sphi 0, %s50
    %s54 = sphi 0, %s53
    %s70 = sphi 0, %s54
    %s74 = sphi 0, %s74
    %s76 = sphi 0, %s74
    %s77 = sphi 0, %s76
    %s91 = sphi 0, %s77
    %s95 = sphi 0, %s95
    %s97 = sphi 0, %s95
    %s98 = sphi 0, %s97
    %s112 = sphi 0, %s98
    %s116 = sphi 0, %s116
    %s118 = sphi 0, %s116
    %s119 = sphi 0, %s118
    %s133 = sphi 0, %s119
    %s137 = sphi 0, %s137
    %s139 = sphi 0, %s137
    %s140 = sphi 0, %s139
    %s154 = sphi 0, %s140
    %s158 = sphi 0, %s158
    %s160 = sphi 0, %s158
    %s161 = sphi 0, %s160
    %s175 = sphi 0, %s161
    %s181 = sphi 0, %s183
    %s184 = sphi 0, %s181
    %s185 = sphi 0, %s184
    %s201 = sphi 0, %s185
  $region4: #{tpu_custom_call.1} parent=0 // loop_header_branch
    %17 = sbr.rel (%p15) target = $region8
  $region5: #{tpu_custom_call.1} parent=0 // loop_body
    %s19 = ssub.s32 %s14, 1
    %s20 = ssub.s32 %s14, 2
    %s21 = sadd.s32 %s14, 1
    %s22 = ssub.s32 %s14, %s21
    %p23 = scmp.eq.s32.totalorder %s22, 0
    %s25 = sadd.s32 %s24, 1
    %s26 = scalar_select %p23, %s24, %s25
    %p29 = pneg %p23
    %p30 = scmp.eq.s32.totalorder %s14, 1
    %p31 = por %p29, %p30
    %p32 = scmp.ne.s32.totalorder %s24, %s27
    %p33 = scmp.eq.s32.totalorder %s14, 0
    %p34 = por %p32, %p33
    %p35 = scmp.ne.s32.totalorder %s24, %s27
    %p36 = scmp.eq.s32.totalorder %s19, 1
    %p37 = por %p35, %p36
    %p38 = scmp.ne.s32.totalorder %s27, %s28
    %p39 = scmp.eq.s32.totalorder %s19, 0
    %p40 = por %p38, %p39
    %p41 = scmp.ne.s32.totalorder %s27, %s28
    %p42 = scmp.eq.s32.totalorder %s20, 1
    %p43 = por %p41, %p42
    %p45 = scmp.ne.s32.totalorder %s28, %s44
    %p46 = scmp.eq.s32.totalorder %s20, 0
    %p47 = por %p45, %p46
    %s48 = ssub.s32 %s14, %s21
    %p49 = scmp.eq.s32.totalorder %s48, 0
    %s51 = sadd.s32 %s50, 1
    %s52 = scalar_select %p49, %s50, %s51
    %p55 = pneg %p49
    %p56 = scmp.eq.s32.totalorder %s14, 1
    %p57 = por %p55, %p56
    %p58 = scmp.ne.s32.totalorder %s50, %s53
    %p59 = scmp.eq.s32.totalorder %s14, 0
    %p60 = por %p58, %p59
    %p61 = scmp.ne.s32.totalorder %s50, %s53
    %p62 = scmp.eq.s32.totalorder %s19, 1
    %p63 = por %p61, %p62
    %p64 = scmp.ne.s32.totalorder %s53, %s54
    %p65 = scmp.eq.s32.totalorder %s19, 0
    %p66 = por %p64, %p65
    %p67 = scmp.ne.s32.totalorder %s53, %s54
    %p68 = scmp.eq.s32.totalorder %s20, 1
    %p69 = por %p67, %p68
    %p71 = scmp.ne.s32.totalorder %s54, %s70
    %p72 = scmp.eq.s32.totalorder %s20, 0
    %p73 = por %p71, %p72
    %s75 = sadd.s32 %s74, 1
    %p78 = scmp.eq.s32.totalorder %s14, 1
    %p79 = scmp.ne.s32.totalorder %s74, %s76
    %p80 = scmp.eq.s32.totalorder %s14, 0
    %p81 = por %p79, %p80
    %p82 = scmp.ne.s32.totalorder %s74, %s76
    %p83 = scmp.eq.s32.totalorder %s19, 1
    %p84 = por %p82, %p83
    %p85 = scmp.ne.s32.totalorder %s76, %s77
    %p86 = scmp.eq.s32.totalorder %s19, 0
    %p87 = por %p85, %p86
    %p88 = scmp.ne.s32.totalorder %s76, %s77
    %p89 = scmp.eq.s32.totalorder %s20, 1
    %p90 = por %p88, %p89
    %p92 = scmp.ne.s32.totalorder %s77, %s91
    %p93 = scmp.eq.s32.totalorder %s20, 0
    %p94 = por %p92, %p93
    %s96 = sadd.s32 %s95, 1
    %p99 = scmp.eq.s32.totalorder %s14, 1
    %p100 = scmp.ne.s32.totalorder %s95, %s97
    %p101 = scmp.eq.s32.totalorder %s14, 0
    %p102 = por %p100, %p101
    %p103 = scmp.ne.s32.totalorder %s95, %s97
    %p104 = scmp.eq.s32.totalorder %s19, 1
    %p105 = por %p103, %p104
    %p106 = scmp.ne.s32.totalorder %s97, %s98
    %p107 = scmp.eq.s32.totalorder %s19, 0
    %p108 = por %p106, %p107
    %p109 = scmp.ne.s32.totalorder %s97, %s98
    %p110 = scmp.eq.s32.totalorder %s20, 1
    %p111 = por %p109, %p110
    %p113 = scmp.ne.s32.totalorder %s98, %s112
    %p114 = scmp.eq.s32.totalorder %s20, 0
    %p115 = por %p113, %p114
    %s117 = sadd.s32 %s116, 1
    %p120 = scmp.eq.s32.totalorder %s14, 1
    %p121 = scmp.ne.s32.totalorder %s116, %s118
    %p122 = scmp.eq.s32.totalorder %s14, 0
    %p123 = por %p121, %p122
    %p124 = scmp.ne.s32.totalorder %s116, %s118
    %p125 = scmp.eq.s32.totalorder %s19, 1
    %p126 = por %p124, %p125
    %p127 = scmp.ne.s32.totalorder %s118, %s119
    %p128 = scmp.eq.s32.totalorder %s19, 0
    %p129 = por %p127, %p128
    %p130 = scmp.ne.s32.totalorder %s118, %s119
    %p131 = scmp.eq.s32.totalorder %s20, 1
    %p132 = por %p130, %p131
    %p134 = scmp.ne.s32.totalorder %s119, %s133
    %p135 = scmp.eq.s32.totalorder %s20, 0
    %p136 = por %p134, %p135
    %s138 = sadd.s32 %s137, 1
    %p141 = scmp.eq.s32.totalorder %s14, 1
    %p142 = scmp.ne.s32.totalorder %s137, %s139
    %p143 = scmp.eq.s32.totalorder %s14, 0
    %p144 = por %p142, %p143
    %p145 = scmp.ne.s32.totalorder %s137, %s139
    %p146 = scmp.eq.s32.totalorder %s19, 1
    %p147 = por %p145, %p146
    %p148 = scmp.ne.s32.totalorder %s139, %s140
    %p149 = scmp.eq.s32.totalorder %s19, 0
    %p150 = por %p148, %p149
    %p151 = scmp.ne.s32.totalorder %s139, %s140
    %p152 = scmp.eq.s32.totalorder %s20, 1
    %p153 = por %p151, %p152
    %p155 = scmp.ne.s32.totalorder %s140, %s154
    %p156 = scmp.eq.s32.totalorder %s20, 0
    %p157 = por %p155, %p156
    %s159 = sadd.s32 %s158, 1
    %p162 = scmp.eq.s32.totalorder %s14, 1
    %p163 = scmp.ne.s32.totalorder %s158, %s160
    %p164 = scmp.eq.s32.totalorder %s14, 0
    %p165 = por %p163, %p164
    %p166 = scmp.ne.s32.totalorder %s158, %s160
    %p167 = scmp.eq.s32.totalorder %s19, 1
    %p168 = por %p166, %p167
    %p169 = scmp.ne.s32.totalorder %s160, %s161
    %p170 = scmp.eq.s32.totalorder %s19, 0
    %p171 = por %p169, %p170
    %p172 = scmp.ne.s32.totalorder %s160, %s161
    %p173 = scmp.eq.s32.totalorder %s20, 1
    %p174 = por %p172, %p173
    %p176 = scmp.ne.s32.totalorder %s161, %s175
    %p177 = scmp.eq.s32.totalorder %s20, 0
    %p178 = por %p176, %p177
    %s179 = ssub.s32 %s14, %s21
    %p180 = scmp.eq.s32.totalorder %s179, 0
    %s182 = sadd.s32 %s181, 1
    %s183 = scalar_select %p180, %s181, %s182
    %p186 = pneg %p180
    %p187 = scmp.eq.s32.totalorder %s14, 1
    %p188 = por %p186, %p187
    %p189 = scmp.ne.s32.totalorder %s181, %s184
    %p190 = scmp.eq.s32.totalorder %s14, 0
    %p191 = por %p189, %p190
    %p192 = scmp.ne.s32.totalorder %s181, %s184
    %p193 = scmp.eq.s32.totalorder %s19, 1
    %p194 = por %p192, %p193
    %p195 = scmp.ne.s32.totalorder %s184, %s185
    %p196 = scmp.eq.s32.totalorder %s19, 0
    %p197 = por %p195, %p196
    %p198 = scmp.ne.s32.totalorder %s184, %s185
    %p199 = scmp.eq.s32.totalorder %s20, 1
    %p200 = por %p198, %p199
    %p202 = scmp.ne.s32.totalorder %s185, %s201
    %p203 = scmp.eq.s32.totalorder %s20, 0
    %p204 = por %p202, %p203
    %p205 = scmp.le.s32.totalorder 1, %s14
    %p206 = scmp.lt.s32.totalorder %s14, 3
    %p207 = pnand %p205, %p206
    %p208 = pneg %p207
    // Predicated region
    $region9: #{tpu_custom_call.1} parent=5 // pred_check
      _
    $region10: #{tpu_custom_call.1} parent=5 // pred_check_branch
      %210 = sbr.rel (%p207) target = $region12
    $region11: #{tpu_custom_call.1} parent=5 // pred_region
      %s211 = ssub.s32 %s14, 1
      // Predicated region
      $region13: #{tpu_custom_call.1} parent=11 // pred_check
        %p212 = pneg %p87
      $region14: #{tpu_custom_call.1} parent=11 // pred_check_branch
        %214 = sbr.rel (%p212) target = $region16
      $region15: #{tpu_custom_call.1} parent=11 // pred_region
        _
      $region16: #{tpu_custom_call.1} parent=11 // pred_fallthru
        _
      // Predicated region
      $region17: #{tpu_custom_call.1} parent=11 // pred_check
        %p215 = pneg %p108
      $region18: #{tpu_custom_call.1} parent=11 // pred_check_branch
        %217 = sbr.rel (%p215) target = $region20
      $region19: #{tpu_custom_call.1} parent=11 // pred_region
        _
      $region20: #{tpu_custom_call.1} parent=11 // pred_fallthru
        _
      // Predicated region
      $region21: #{tpu_custom_call.1} parent=11 // pred_check
        %p218 = pneg %p129
      $region22: #{tpu_custom_call.1} parent=11 // pred_check_branch
        %220 = sbr.rel (%p218) target = $region24
      $region23: #{tpu_custom_call.1} parent=11 // pred_region
        _
      $region24: #{tpu_custom_call.1} parent=11 // pred_fallthru
        _
      // Predicated region
      $region25: #{tpu_custom_call.1} parent=11 // pred_check
        %p221 = pneg %p150
      $region26: #{tpu_custom_call.1} parent=11 // pred_check_branch
        %223 = sbr.rel (%p221) target = $region28
      $region27: #{tpu_custom_call.1} parent=11 // pred_region
        _
      $region28: #{tpu_custom_call.1} parent=11 // pred_fallthru
        _
      // Predicated region
      $region29: #{tpu_custom_call.1} parent=11 // pred_check
        %p224 = pneg %p171
      $region30: #{tpu_custom_call.1} parent=11 // pred_check_branch
        %226 = sbr.rel (%p224) target = $region32
      $region31: #{tpu_custom_call.1} parent=11 // pred_region
        _
      $region32: #{tpu_custom_call.1} parent=11 // pred_fallthru
        _
    $region12: #{tpu_custom_call.1} parent=5 // pred_fallthru
      _
    %p227 = scmp.lt.s32.totalorder %s14, 2
    // Predicated region
    $region33: #{tpu_custom_call.1} parent=5 // pred_check
      %p228 = pneg %p227
    $region34: #{tpu_custom_call.1} parent=5 // pred_check_branch
      %230 = sbr.rel (%p228) target = $region36
    $region35: #{tpu_custom_call.1} parent=5 // pred_region
      // Predicated region
      $region37: #{tpu_custom_call.1} parent=35 // pred_check
        %p231 = pneg %p34
      $region38: #{tpu_custom_call.1} parent=35 // pred_check_branch
        %233 = sbr.rel (%p231) target = $region40
      $region39: #{tpu_custom_call.1} parent=35 // pred_region
        %p234 = scmp.lt.s32.totalorder %s14, 1
        %s235 = scalar_select %p234, %s14, 1
        %s236 = smul.addr %s235, 8
        %s237 = smul.addr %s236, 8
        %s238 = scalar_lea.vmem %s0, %s237
      $region40: #{tpu_custom_call.1} parent=35 // pred_fallthru
        _
      // Predicated region
      $region41: #{tpu_custom_call.1} parent=35 // pred_check
        %p239 = pneg %p60
      $region42: #{tpu_custom_call.1} parent=35 // pred_check_branch
        %241 = sbr.rel (%p239) target = $region44
      $region43: #{tpu_custom_call.1} parent=35 // pred_region
        %p242 = scmp.lt.s32.totalorder %s14, 1
        %s243 = scalar_select %p242, %s14, 1
        %s244 = smul.addr %s243, 8
        %s245 = smul.addr %s244, 4
        %s246 = scalar_lea.vmem %s1, %s245
      $region44: #{tpu_custom_call.1} parent=35 // pred_fallthru
        _
    $region36: #{tpu_custom_call.1} parent=5 // pred_fallthru
      _
    %p247 = scmp.le.s32.totalorder 1, %s14
    %p248 = scmp.lt.s32.totalorder %s14, 3
    %p249 = pnand %p247, %p248
    %p250 = pneg %p249
    // Predicated region
    $region45: #{tpu_custom_call.1} parent=5 // pred_check
      _
    $region46: #{tpu_custom_call.1} parent=5 // pred_check_branch
      %252 = sbr.rel (%p249) target = $region48
    $region47: #{tpu_custom_call.1} parent=5 // pred_region
      %s253 = ssub.s32 %s14, 1
      %p254 = scmp.lt.s32.totalorder %s19, 1
      %s255 = scalar_select %p254, %s19, 1
      %s256 = smul.addr %s255, 8
      %s257 = smul.addr %s256, 8
      %s258 = scalar_lea.vmem %s0, %s257
      %p259 = pneg %p40
      %p260 = pneg %p37
      %p261 = scmp.lt.s32.totalorder %s19, 1
      %s262 = scalar_select %p261, %s19, 1
      %s263 = smul.addr %s262, 8
      %s264 = smul.addr %s263, 4
      %s265 = scalar_lea.vmem %s1, %s264
      %p266 = pneg %p66
      %p267 = pneg %p63
      %p268 = pneg %p87
      %p269 = pneg %p84
      %p270 = pneg %p108
      %p271 = pneg %p105
      %p272 = pneg %p129
      %p273 = pneg %p126
      %p274 = pneg %p150
      %p275 = pneg %p147
      %p276 = pneg %p171
      %p277 = pneg %p168
      %p278 = pneg %p197
      %p279 = pneg %p194
      %p280 = scmp.lt.s32.totalorder %s19, 1
      %s281 = scalar_select %p280, %s19, 1
      %s282 = smul.addr %s281, 8
      %s283 = smul.addr %s282, 8
      %s284 = scalar_lea.vmem %s7, %s283
      %p285 = scmp.lt.s32.totalorder %s19, 1
      %s286 = scalar_select %p285, %s19, 1
      %s287 = smul.addr %s286, 8
      %s288 = smul.addr %s287, 8
      %s289 = scalar_lea.vmem %s0, %s288
      %p290 = scmp.lt.s32.totalorder %s19, 1
      %s291 = scalar_select %p290, %s19, 1
      %s292 = smul.addr %s291, 8
      %s293 = smul.addr %s292, 4
      %s294 = scalar_lea.vmem %s1, %s293
      %p295 = scmp.lt.s32.totalorder %s19, 1
      %s296 = scalar_select %p295, %s19, 1
      %s297 = smul.addr %s296, 8
      %s298 = smul.addr %s297, 8
      %s299 = scalar_lea.vmem %s7, %s298
      %s301 = sld [smem:[#allocation2]]
      %v302 = vld [vmem:[%s289] sm:$0xff]
      %v303 = vld [vmem:[%s289 + $0x8] sm:$0xff]
      %v304 = vld [vmem:[%s289 + $0x10] sm:$0xff]
      %v305 = vld [vmem:[%s289 + $0x18] sm:$0xff]
      %v306 = vld [vmem:[%s289 + $0x20] sm:$0xff]
      %v307 = vld [vmem:[%s289 + $0x28] sm:$0xff]
      %v308 = vld [vmem:[%s289 + $0x30] sm:$0xff]
      %v309 = vld [vmem:[%s289 + $0x38] sm:$0xff]
      %v310 = vpack.c.bf16 %v303, %v302
      %v311 = vpack.c.bf16 %v305, %v304
      %v312 = vpack.c.bf16 %v307, %v306
      %v313 = vpack.c.bf16 %v309, %v308
      %v314 = vld [vmem:[%s294] sm:$0xf]
      %v315 = vld [vmem:[%s294 + $0x4] sm:$0xf]
      %v316 = vld [vmem:[%s294 + $0x8] sm:$0xf]
      %v317 = vld [vmem:[%s294 + $0xc] sm:$0xf]
      %v318 = vld [vmem:[%s294 + $0x10] sm:$0xf]
      %v319 = vld [vmem:[%s294 + $0x14] sm:$0xf]
      %v320 = vld [vmem:[%s294 + $0x18] sm:$0xf]
      %v321 = vld [vmem:[%s294 + $0x1c] sm:$0xf]
      %v322 = vld [vmem:[%s2] sm:$0xf]
      %v323 = vld [vmem:[%s2 + $0x4] sm:$0xf]
      %v324 = vld [vmem:[%s2 + $0x8] sm:$0xf]
      %v325 = vld [vmem:[%s2 + $0xc] sm:$0xf]
      %v326 = vld [vmem:[%s3] sm:$0x1]
      %v328 = vperm.slane %v326, 0
      %v334 = vunpack.c.l.b16 %v322
      %v335 = vunpack.c.l.b16 %v323
      %v336 = vunpack.c.l.b16 %v324
      %v337 = vunpack.c.l.b16 %v325
      %v338 = vpack.c.b16 %v335, %v334
      %v339 = vpack.c.b16 %v337, %v336
      %vm342 = vcmask 261120
      %v344 = vsel %vm342, %v310, 0
      %v347 = vsel %vm342, %v311, 0
      %v350 = vsel %vm342, %v312, 0
      %v353 = vsel %vm342, %v313, 0
      %355 = vmatpush.bf16.msra.mxu0 0
      %356 = vmatpush.bf16.msra.mxu0 0
      %357 = vmatpush.bf16.msra.mxu0 0
      %358 = vmatpush.bf16.msra.mxu0 0
      %359 = vmatpush.bf16.msra.mxu0 0
      %360 = vmatpush.bf16.msra.mxu0 0
      %361 = vmatpush.bf16.msra.mxu0 %v339
      %362 = vmatpush.bf16.msra.mxu0 %v338
      %363 = vmatmul.bf16.gmra.mxu0 %v344
      %v364 = vpop.f32.mrf.mxu0
      %v365 = vadd.f32 %v328, %v364
      %v366 = vpop.f32.mrf.mxu0
      %v367 = vadd.f32 %v328, %v366
      %368 = vmatmul.bf16.gmra.mxu0 %v347
      %v369 = vpop.f32.mrf.mxu0
      %v370 = vadd.f32 %v328, %v369
      %v371 = vpop.f32.mrf.mxu0
      %v372 = vadd.f32 %v328, %v371
      %373 = vmatmul.bf16.gmra.mxu0 %v350
      %v374 = vpop.f32.mrf.mxu0
      %v375 = vadd.f32 %v328, %v374
      %v376 = vpop.f32.mrf.mxu0
      %v377 = vadd.f32 %v328, %v376
      %378 = vmatmul.bf16.gmra.mxu0 %v353
      %v379 = vpop.f32.mrf.mxu0
      %v380 = vadd.f32 %v328, %v379
      %v381 = vpop.f32.mrf.mxu0
      %v382 = vadd.f32 %v328, %v381
      %383 = vdwg.mxu0
      %v384 = vpack.c.bf16 %v367, %v365
      %v385 = vpack.c.bf16 %v372, %v370
      %v386 = vpack.c.bf16 %v377, %v375
      %v387 = vpack.c.bf16 %v382, %v380
      %v396 = vunpack.c.l.b16 %v314
      %v397 = vunpack.c.l.b16 %v315
      %v398 = vunpack.c.l.b16 %v316
      %v399 = vunpack.c.l.b16 %v317
      %v400 = vunpack.c.l.b16 %v318
      %v401 = vunpack.c.l.b16 %v319
      %v402 = vunpack.c.l.b16 %v320
      %v403 = vunpack.c.l.b16 %v321
      %v404 = vpack.c.b16 %v397, %v396
      %v405 = vpack.c.b16 %v399, %v398
      %v406 = vpack.c.b16 %v401, %v400
      %v407 = vpack.c.b16 %v403, %v402
      %v409 = vsel %vm342, %v384, 0
      %v412 = vsel %vm342, %v385, 0
      %v415 = vsel %vm342, %v386, 0
      %v418 = vsel %vm342, %v387, 0
      %v421 = vsel %vm342, %v404, 0
      %v424 = vsel %vm342, %v405, 0
      %v427 = vsel %vm342, %v406, 0
      %v430 = vsel %vm342, %v407, 0
      %432 = vmatpush.bf16.xpose.msra.mxu0 0
      %433 = vmatpush.bf16.xpose.msra.mxu0 0
      %434 = vmatpush.bf16.xpose.msra.mxu0 0
      %435 = vmatpush.bf16.xpose.msra.mxu0 0
      %436 = vmatpush.bf16.xpose.msra.mxu0 %v430
      %437 = vmatpush.bf16.xpose.msra.mxu0 %v427
      %438 = vmatpush.bf16.xpose.msra.mxu0 %v424
      %439 = vmatpush.bf16.xpose.msra.mxu0 %v421
      %440 = vmatmul.bf16.gmra.mxu0 %v409
      %v441 = vpop.f32.mrf.mxu0
      %v442 = vadd.f32 0.0, %v441
      %v443 = vpop.f32.mrf.mxu0
      %v444 = vadd.f32 0.0, %v443
      %445 = vmatmul.bf16.gmra.mxu0 %v412
      %v446 = vpop.f32.mrf.mxu0
      %v447 = vadd.f32 0.0, %v446
      %v448 = vpop.f32.mrf.mxu0
      %v449 = vadd.f32 0.0, %v448
      %450 = vmatmul.bf16.gmra.mxu0 %v415
      %v451 = vpop.f32.mrf.mxu0
      %v452 = vadd.f32 0.0, %v451
      %v453 = vpop.f32.mrf.mxu0
      %v454 = vadd.f32 0.0, %v453
      %455 = vmatmul.bf16.gmra.mxu0 %v418
      %v456 = vpop.f32.mrf.mxu0
      %v457 = vadd.f32 0.0, %v456
      %v458 = vpop.f32.mrf.mxu0
      %v459 = vadd.f32 0.0, %v458
      %460 = vdwg.mxu0
      %vm461 = vcmask 523264
      %v462 = vsel %vm461, %v442, -inf
      %463 = vmax.xlane.f32.xlu0 %v462
      %v464 = vpop.xlane.xlu0 %463
      %v465 = vsel %vm461, %v444, -inf
      %466 = vmax.xlane.f32.xlu0 %v465
      %v467 = vpop.xlane.xlu0 %466
      %v468 = vsel %vm461, %v447, -inf
      %469 = vmax.xlane.f32.xlu0 %v468
      %v470 = vpop.xlane.xlu0 %469
      %v471 = vsel %vm461, %v449, -inf
      %472 = vmax.xlane.f32.xlu0 %v471
      %v473 = vpop.xlane.xlu0 %472
      %v474 = vsel %vm461, %v452, -inf
      %475 = vmax.xlane.f32.xlu0 %v474
      %v476 = vpop.xlane.xlu0 %475
      %v477 = vsel %vm461, %v454, -inf
      %478 = vmax.xlane.f32.xlu0 %v477
      %v479 = vpop.xlane.xlu0 %478
      %v480 = vsel %vm461, %v457, -inf
      %481 = vmax.xlane.f32.xlu0 %v480
      %v482 = vpop.xlane.xlu0 %481
      %v483 = vsel %vm461, %v459, -inf
      %484 = vmax.xlane.f32.xlu0 %v483
      %v485 = vpop.xlane.xlu0 %484
      %v486 = vsub.f32 %v442, %v464
      %v487 = vsub.f32 %v444, %v467
      %v488 = vsub.f32 %v447, %v470
      %v489 = vsub.f32 %v449, %v473
      %v490 = vsub.f32 %v452, %v476
      %v491 = vsub.f32 %v454, %v479
      %v492 = vsub.f32 %v457, %v482
      %v493 = vsub.f32 %v459, %v485
      %v494 = vmul.f32 %v486, 1.442695
      %v495 = vpow.pop %v494
      %v496 = vmul.f32 %v487, 1.442695
      %v497 = vpow.pop %v496
      %v498 = vmul.f32 %v488, 1.442695
      %v499 = vpow.pop %v498
      %v500 = vmul.f32 %v489, 1.442695
      %v501 = vpow.pop %v500
      %v502 = vmul.f32 %v490, 1.442695
      %v503 = vpow.pop %v502
      %v504 = vmul.f32 %v491, 1.442695
      %v505 = vpow.pop %v504
      %v506 = vmul.f32 %v492, 1.442695
      %v507 = vpow.pop %v506
      %v508 = vmul.f32 %v493, 1.442695
      %v509 = vpow.pop %v508
      %v510 = vsel %vm461, %v495, 0.0
      %511 = vadd.xlane.f32.xlu0 %v510
      %v512 = vpop.xlane.xlu0 %511
      %v513 = vsel %vm461, %v497, 0.0
      %514 = vadd.xlane.f32.xlu0 %v513
      %v515 = vpop.xlane.xlu0 %514
      %v516 = vsel %vm461, %v499, 0.0
      %517 = vadd.xlane.f32.xlu0 %v516
      %v518 = vpop.xlane.xlu0 %517
      %v519 = vsel %vm461, %v501, 0.0
      %520 = vadd.xlane.f32.xlu0 %v519
      %v521 = vpop.xlane.xlu0 %520
      %v522 = vsel %vm461, %v503, 0.0
      %523 = vadd.xlane.f32.xlu0 %v522
      %v524 = vpop.xlane.xlu0 %523
      %v525 = vsel %vm461, %v505, 0.0
      %526 = vadd.xlane.f32.xlu0 %v525
      %v527 = vpop.xlane.xlu0 %526
      %v528 = vsel %vm461, %v507, 0.0
      %529 = vadd.xlane.f32.xlu0 %v528
      %v530 = vpop.xlane.xlu0 %529
      %v531 = vsel %vm461, %v509, 0.0
      %532 = vadd.xlane.f32.xlu0 %v531
      %v533 = vpop.xlane.xlu0 %532
      %v534 = vld [vmem:[%s4] sm:$0xf]
      %v535 = vld [vmem:[%s4 + $0x4] sm:$0xf]
      %v536 = vld [vmem:[%s4 + $0x8] sm:$0xf]
      %v537 = vld [vmem:[%s4 + $0xc] sm:$0xf]
      %v538 = vld [vmem:[%s5] sm:$0x1]
      %v540 = vperm.slane %v538, 0
      %v546 = vunpack.c.l.b16 %v534
      %v547 = vunpack.c.l.b16 %v535
      %v548 = vunpack.c.l.b16 %v536
      %v549 = vunpack.c.l.b16 %v537
      %v550 = vpack.c.b16 %v547, %v546
      %v551 = vpack.c.b16 %v549, %v548
      %554 = vmatpush.bf16.msra.mxu0 0
      %555 = vmatpush.bf16.msra.mxu0 0
      %556 = vmatpush.bf16.msra.mxu0 0
      %557 = vmatpush.bf16.msra.mxu0 0
      %558 = vmatpush.bf16.msra.mxu0 0
      %559 = vmatpush.bf16.msra.mxu0 0
      %560 = vmatpush.bf16.msra.mxu0 %v551
      %561 = vmatpush.bf16.msra.mxu0 %v550
      %562 = vmatmul.bf16.gmra.mxu0 %v421
      %v563 = vpop.f32.mrf.mxu0
      %v564 = vadd.f32 %v540, %v563
      %v565 = vpop.f32.mrf.mxu0
      %v566 = vadd.f32 %v540, %v565
      %567 = vmatmul.bf16.gmra.mxu0 %v424
      %v568 = vpop.f32.mrf.mxu0
      %v569 = vadd.f32 %v540, %v568
      %v570 = vpop.f32.mrf.mxu0
      %v571 = vadd.f32 %v540, %v570
      %572 = vmatmul.bf16.gmra.mxu0 %v427
      %v573 = vpop.f32.mrf.mxu0
      %v574 = vadd.f32 %v540, %v573
      %v575 = vpop.f32.mrf.mxu0
      %v576 = vadd.f32 %v540, %v575
      %577 = vmatmul.bf16.gmra.mxu0 %v430
      %v578 = vpop.f32.mrf.mxu0
      %v579 = vadd.f32 %v540, %v578
      %v580 = vpop.f32.mrf.mxu0
      %v581 = vadd.f32 %v540, %v580
      %582 = vdwg.mxu0
      %v583 = vpack.c.bf16 %v497, %v495
      %v584 = vpack.c.bf16 %v501, %v499
      %v585 = vpack.c.bf16 %v505, %v503
      %v586 = vpack.c.bf16 %v509, %v507
      %v587 = vpack.c.bf16 %v566, %v564
      %v588 = vpack.c.bf16 %v571, %v569
      %v589 = vpack.c.bf16 %v576, %v574
      %v590 = vpack.c.bf16 %v581, %v579
      %v592 = vsel %vm461, %v583, 0
      %v595 = vsel %vm461, %v584, 0
      %v598 = vsel %vm461, %v585, 0
      %v601 = vsel %vm461, %v586, 0
      %603 = vmatpush.bf16.msra.mxu0 0
      %604 = vmatpush.bf16.msra.mxu0 0
      %605 = vmatpush.bf16.msra.mxu0 0
      %606 = vmatpush.bf16.msra.mxu0 0
      %607 = vmatpush.bf16.msra.mxu0 %v590
      %608 = vmatpush.bf16.msra.mxu0 %v589
      %609 = vmatpush.bf16.msra.mxu0 %v588
      %610 = vmatpush.bf16.msra.mxu0 %v587
      %611 = vmatmul.bf16.gmra.mxu0 %v592
      %v612 = vpop.f32.mrf.mxu0
      %v613 = vadd.f32 0.0, %v612
      %v614 = vpop.f32.mrf.mxu0
      %v615 = vadd.f32 0.0, %v614
      %616 = vmatmul.bf16.gmra.mxu0 %v595
      %v617 = vpop.f32.mrf.mxu0
      %v618 = vadd.f32 0.0, %v617
      %v619 = vpop.f32.mrf.mxu0
      %v620 = vadd.f32 0.0, %v619
      %621 = vmatmul.bf16.gmra.mxu0 %v598
      %v622 = vpop.f32.mrf.mxu0
      %v623 = vadd.f32 0.0, %v622
      %v624 = vpop.f32.mrf.mxu0
      %v625 = vadd.f32 0.0, %v624
      %626 = vmatmul.bf16.gmra.mxu0 %v601
      %v627 = vpop.f32.mrf.mxu0
      %v628 = vadd.f32 0.0, %v627
      %v629 = vpop.f32.mrf.mxu0
      %v630 = vadd.f32 0.0, %v629
      %631 = vdwg.mxu0
      %v632 = vrcp.pop %v512
      %v633 = vrcp.pop %v515
      %v634 = vrcp.pop %v518
      %v635 = vrcp.pop %v521
      %v636 = vrcp.pop %v524
      %v637 = vrcp.pop %v527
      %v638 = vrcp.pop %v530
      %v639 = vrcp.pop %v533
      %v640 = vmul.f32 %v613, %v632
      %v641 = vmul.f32 %v615, %v633
      %v642 = vmul.f32 %v618, %v634
      %v643 = vmul.f32 %v620, %v635
      %v644 = vmul.f32 %v623, %v636
      %v645 = vmul.f32 %v625, %v637
      %v646 = vmul.f32 %v628, %v638
      %v647 = vmul.f32 %v630, %v639
      %v648 = vstv %s301
      %v649 = vmul.f32 %v648, %v640
      %v650 = vmul.f32 %v648, %v641
      %v651 = vmul.f32 %v648, %v642
      %v652 = vmul.f32 %v648, %v643
      %v653 = vmul.f32 %v648, %v644
      %v654 = vmul.f32 %v648, %v645
      %v655 = vmul.f32 %v648, %v646
      %v656 = vmul.f32 %v648, %v647
      %v657 = vadd.f32 %v649, %v302
      %v658 = vadd.f32 %v650, %v303
      %v659 = vadd.f32 %v651, %v304
      %v660 = vadd.f32 %v652, %v305
      %v661 = vadd.f32 %v653, %v306
      %v662 = vadd.f32 %v654, %v307
      %v663 = vadd.f32 %v655, %v308
      %v664 = vadd.f32 %v656, %v309
      %665 = vst.msk [vmem:[%s299] sm:$0xff] %vm342, %v657
      %666 = vst.msk [vmem:[%s299 + $0x8] sm:$0xff] %vm342, %v658
      %667 = vst.msk [vmem:[%s299 + $0x10] sm:$0xff] %vm342, %v659
      %668 = vst.msk [vmem:[%s299 + $0x18] sm:$0xff] %vm342, %v660
      %669 = vst.msk [vmem:[%s299 + $0x20] sm:$0xff] %vm342, %v661
      %670 = vst.msk [vmem:[%s299 + $0x28] sm:$0xff] %vm342, %v662
      %671 = vst.msk [vmem:[%s299 + $0x30] sm:$0xff] %vm342, %v663
      %672 = vst.msk [vmem:[%s299 + $0x38] sm:$0xff] %vm342, %v664
      %p673 = scmp.lt.s32.totalorder %s19, 1
      %s674 = scalar_select %p673, %s19, 1
      %s675 = smul.addr %s674, 8
      %s676 = smul.addr %s675, 8
      %s677 = scalar_lea.vmem %s7, %s676
      // Predicated region
      $region49: #{tpu_custom_call.1} parent=47 // pred_check
        %p678 = pneg %p194
      $region50: #{tpu_custom_call.1} parent=47 // pred_check_branch
        %680 = sbr.rel (%p678) target = $region52
      $region51: #{tpu_custom_call.1} parent=47 // pred_region
        _
      $region52: #{tpu_custom_call.1} parent=47 // pred_fallthru
        _
    $region48: #{tpu_custom_call.1} parent=5 // pred_fallthru
      _
    %p681 = scmp.le.s32.totalorder 2, %s14
    // Predicated region
    $region53: #{tpu_custom_call.1} parent=5 // pred_check
      %p682 = pneg %p681
    $region54: #{tpu_custom_call.1} parent=5 // pred_check_branch
      %684 = sbr.rel (%p682) target = $region56
    $region55: #{tpu_custom_call.1} parent=5 // pred_region
      %s685 = ssub.s32 %s14, 2
      // Predicated region
      $region57: #{tpu_custom_call.1} parent=55 // pred_check
        %p686 = pneg %p200
      $region58: #{tpu_custom_call.1} parent=55 // pred_check_branch
        %688 = sbr.rel (%p686) target = $region60
      $region59: #{tpu_custom_call.1} parent=55 // pred_region
        %p689 = scmp.lt.s32.totalorder %s20, 1
        %s690 = scalar_select %p689, %s20, 1
        %s691 = smul.addr %s690, 8
        %s692 = smul.addr %s691, 8
        %s693 = scalar_lea.vmem %s7, %s692
      $region60: #{tpu_custom_call.1} parent=55 // pred_fallthru
        _
    $region56: #{tpu_custom_call.1} parent=5 // pred_fallthru
      _
  $region6: #{tpu_custom_call.1} parent=0 // loop_footer
    %s18 = sadd.s32 1, %s14
  $region7: #{tpu_custom_call.1} parent=0 // loop_footer_branch
    %13 = sbr.rel target = $region3
  $region8: #{tpu_custom_call.1} parent=0 // loop_exit
    _

</llo_original>
